<compile_context>
chip_gen: v7x
topology: tpu7x:2x2x1
jax: 0.10.0
libtpu: 0.0.40
codegen_flags: <defaults>
</compile_context>

<pallas_src>
import jax
import jax.numpy as jnp
from jax.experimental import pallas as pl
from jax.experimental.pallas import tpu as pltpu

LANE = 128


def _round_up(n, m):
    return ((n + m - 1) // m) * m


# ---------------------------------------------------------------------------
# Kernel
# ---------------------------------------------------------------------------
def ppo_fused_kernel(x_ref, w1_ref, w2_ref, wh_ref, bias_ref, out_ref):
    """Fused feature-extractor + (mean || value) head.

    x_ref   : (TB, input_dim)
    w1_ref  : (input_dim, HP)       hidden zero-padded to HP (multiple of 128)
    w2_ref  : (HP, HP)
    wh_ref  : (HP, HEAD_PAD)        columns = [wm | wv | zero padding]
    bias_ref: (3, max(HP,HEAD_PAD)) rows = [b1 | b2 | (bm,bv)], zero-padded
    out_ref : (TB, HEAD_PAD)        lane-dense output slab
    """
    hp = w1_ref.shape[1]
    head_pad = wh_ref.shape[1]

    x = x_ref[...]
    bias = bias_ref[...]
    b1 = bias[0:1, :hp]
    b2 = bias[1:2, :hp]
    bh = bias[2:3, :head_pad]

    # feature_extractor: Linear -> ReLU -> Linear -> ReLU  (f32 accumulation)
    h = jnp.dot(x, w1_ref[...], preferred_element_type=jnp.float32) + b1
    h = jnp.maximum(h, 0.0)
    h = jnp.dot(h, w2_ref[...], preferred_element_type=jnp.float32) + b2
    h = jnp.maximum(h, 0.0)

    # fused [policy_mean | value] head -> one lane-dense store
    out_ref[...] = (
        jnp.dot(h, wh_ref[...], preferred_element_type=jnp.float32) + bh
    )


# ---------------------------------------------------------------------------
# Parameter packing (fusion + lane padding, done once outside the kernel)
# ---------------------------------------------------------------------------
def pack_params(params, dtype=jnp.float32):
    """Fuse heads, pad hidden/head dims to 128 lanes, pack biases into one slab.

    `dtype` controls the weight storage dtype (use jnp.bfloat16 on v6e/v7x to
    halve weight DMA bytes; accumulation stays f32 via preferred_element_type).
    """
    w1, b1 = params["w1"], params["b1"]
    w2, b2 = params["w2"], params["b2"]
    wm, bm = params["wm"], params["bm"]
    wv, bv = params["wv"], params["bv"]

    input_dim, hidden = w1.shape
    output_dim = wm.shape[1]
    head = output_dim + 1                       # mean cols + 1 value col

    hp = _round_up(hidden, LANE)
    head_pad = _round_up(head, LANE)
    bias_w = max(hp, head_pad)

    w1p = jnp.zeros((input_dim, hp), dtype).at[:, :hidden].set(w1.astype(dtype))
    w2p = jnp.zeros((hp, hp), dtype).at[:hidden, :hidden].set(w2.astype(dtype))

    whp = jnp.zeros((hp, head_pad), dtype)
    whp = whp.at[:hidden, :output_dim].set(wm.astype(dtype))
    whp = whp.at[:hidden, output_dim:head].set(wv.astype(dtype))

    bias = jnp.zeros((3, bias_w), jnp.float32)
    bias = bias.at[0, :hidden].set(b1.astype(jnp.float32))
    bias = bias.at[1, :hidden].set(b2.astype(jnp.float32))
    bias = bias.at[2, :output_dim].set(bm.astype(jnp.float32))
    bias = bias.at[2, output_dim:head].set(bv.astype(jnp.float32))

    # action_std = exp(logstd) is batch-independent: compute once here.
    std = jnp.exp(params["logstd"].astype(jnp.float32))

    return dict(
        w1=w1p, w2=w2p, wh=whp, bias=bias, std=std,
        meta=dict(input_dim=input_dim, hidden=hidden, output_dim=output_dim,
                  hp=hp, head_pad=head_pad),
    )


# ---------------------------------------------------------------------------
# Wrapper
# ---------------------------------------------------------------------------
def ppo_forward(x, packed, *, block_b=512):
    """PPONetwork forward on TPU via Pallas.

    Returns (action_mean [B, output_dim], action_std [output_dim], value [B, 1]).
    """
    meta = packed["meta"]
    input_dim = meta["input_dim"]
    output_dim = meta["output_dim"]
    hp = meta["hp"]
    head_pad = meta["head_pad"]
    bias_w = packed["bias"].shape[1]

    B = x.shape[0]
    assert x.shape[1] == input_dim

    # Batch tile: multiple of 8 sublanes; large batches amortize grid overhead
    # and pipeline x-DMA against MXU work with weights resident across steps.
    tb = min(block_b, _round_up(B, 8))
    b_pad = _round_up(B, tb)

    x_in = x.astype(packed["w1"].dtype)
    if b_pad != B:
        x_in = jnp.zeros((b_pad, input_dim), x_in.dtype).at[:B].set(x_in)

    grid = (b_pad // tb,)

    out = pl.pallas_call(
        ppo_fused_kernel,
        out_shape=jax.ShapeDtypeStruct((b_pad, head_pad), jnp.float32),
        grid_spec=pltpu.PrefetchScalarGridSpec(
            num_scalar_prefetch=0,
            grid=grid,
            in_specs=[
                pl.BlockSpec((tb, input_dim), lambda i: (i, 0)),   # x: batch-tiled
                pl.BlockSpec((input_dim, hp), lambda i: (0, 0)),   # weights resident
                pl.BlockSpec((hp, hp), lambda i: (0, 0)),
                pl.BlockSpec((hp, head_pad), lambda i: (0, 0)),
                pl.BlockSpec((3, bias_w), lambda i: (0, 0)),       # packed biases
            ],
            out_specs=pl.BlockSpec((tb, head_pad), lambda i: (i, 0)),
        ),
        compiler_params=pltpu.CompilerParams(
            dimension_semantics=("parallel",),   # shards batch across TCs on v7x
        ),
    )(x_in, packed["w1"], packed["w2"], packed["wh"], packed["bias"])

    head = out[:B]
    action_mean = head[:, :output_dim]
    value = head[:, output_dim:output_dim + 1]
    action_std = packed["std"]          # shape (output_dim,), like PyTorch
    return action_mean, action_std, value


# ---------------------------------------------------------------------------
# Synthetic params + pure-JAX reference
# ---------------------------------------------------------------------------
def init_params(key, input_dim, output_dim, hidden_dim=64):
    """Deterministic PyTorch-like uniform fan-in init (W stored (in, out))."""
    keys = jax.random.split(key, 8)

    def linear(kw, kb, fan_in, fan_out):
        bound = 1.0 / jnp.sqrt(fan_in)
        w = jax.random.uniform(kw, (fan_in, fan_out), jnp.float32, -bound, bound)
        b = jax.random.uniform(kb, (fan_out,), jnp.float32, -bound, bound)
        return w, b

    w1, b1 = linear(keys[0], keys[1], input_dim, hidden_dim)
    w2, b2 = linear(keys[2], keys[3], hidden_dim, hidden_dim)
    wm, bm = linear(keys[4], keys[5], hidden_dim, output_dim)
    wv, bv = linear(keys[6], keys[7], hidden_dim, 1)
    logstd = jnp.zeros((output_dim,), jnp.float32)   # nn.Parameter(torch.zeros(output_dim))

    return dict(w1=w1, b1=b1, w2=w2, b2=b2, wm=wm, bm=bm, wv=wv, bv=bv,
                logstd=logstd)


def ppo_forward_ref(x, p):
    h = jnp.maximum(x @ p["w1"] + p["b1"], 0.0)
    h = jnp.maximum(h @ p["w2"] + p["b2"], 0.0)
    mean = h @ p["wm"] + p["bm"]
    value = h @ p["wv"] + p["bv"]
    std = jnp.exp(p["logstd"])
    return mean, std, value


if __name__ == "__main__":
    key = jax.random.PRNGKey(0)
    k_param, k_x = jax.random.split(key)

    batch = 8
    input_dim = 16
    output_dim = 4
    hidden_dim = 64

    raw_params = init_params(k_param, input_dim, output_dim, hidden_dim)
    packed = pack_params(raw_params, dtype=jnp.float32)
    x = jax.random.normal(k_x, (batch, input_dim), jnp.float32)

    mean, std, value = ppo_forward(x, packed)
    jax.block_until_ready((mean, std, value))

    # sanity check against pure-JAX reference
    mean_r, std_r, value_r = ppo_forward_ref(x, raw_params)
    assert mean.shape == (batch, output_dim)
    assert std.shape == (output_dim,)
    assert value.shape == (batch, 1)
    assert jnp.allclose(mean, mean_r, atol=1e-5)
    assert jnp.allclose(std, std_r, atol=1e-6)
    assert jnp.allclose(value, value_r, atol=1e-5)

    print("KERNEL_OK")
</pallas_src>

<mosaic_0001>
module attributes {stable_mosaic.version = 11 : i64} {
  func.func @ppo_fused_kernel(%arg0: i32, %arg1: memref<8x16xf32, #tpu.memory_space<vmem>>, %arg2: memref<16x128xf32, #tpu.memory_space<vmem>>, %arg3: memref<128x128xf32, #tpu.memory_space<vmem>>, %arg4: memref<128x128xf32, #tpu.memory_space<vmem>>, %arg5: memref<3x128xf32, #tpu.memory_space<vmem>>, %arg6: memref<8x128xf32, #tpu.memory_space<vmem>>) attributes {dimension_semantics = [#tpu.dimension_semantics<parallel>], iteration_bounds = array<i64: 1>, scalar_prefetch = 0 : i64, scratch_operands = 0 : i64, tpu.core_type = #tpu.core_type<tc>, window_params = [{transform_indices = @transform_0, window_bounds = array<i64: 8, 16>}, {pipeline_mode = #tpu.pipeline_mode<synchronous>, transform_indices = @transform_1, window_bounds = array<i64: 16, 128>}, {pipeline_mode = #tpu.pipeline_mode<synchronous>, transform_indices = @transform_2, window_bounds = array<i64: 128, 128>}, {pipeline_mode = #tpu.pipeline_mode<synchronous>, transform_indices = @transform_3, window_bounds = array<i64: 128, 128>}, {pipeline_mode = #tpu.pipeline_mode<synchronous>, transform_indices = @transform_4, window_bounds = array<i64: 3, 128>}, {transform_indices = @transform_5, window_bounds = array<i64: 8, 128>}]} {
    %c0 = arith.constant 0 : index
    %c0_0 = arith.constant 0 : index
    %0 = vector.load %arg1[%c0, %c0_0] : memref<8x16xf32, #tpu.memory_space<vmem>>, vector<8x16xf32>
    %c0_1 = arith.constant 0 : index
    %c0_2 = arith.constant 0 : index
    %1 = vector.load %arg5[%c0_1, %c0_2] : memref<3x128xf32, #tpu.memory_space<vmem>>, vector<3x128xf32>
    %2 = vector.extract_strided_slice %1 {offsets = [0, 0], sizes = [1, 128], strides = [1, 1]} : vector<3x128xf32> to vector<1x128xf32>
    %3 = vector.extract_strided_slice %1 {offsets = [1, 0], sizes = [1, 128], strides = [1, 1]} : vector<3x128xf32> to vector<1x128xf32>
    %4 = vector.extract_strided_slice %1 {offsets = [2, 0], sizes = [1, 128], strides = [1, 1]} : vector<3x128xf32> to vector<1x128xf32>
    %c0_3 = arith.constant 0 : index
    %c0_4 = arith.constant 0 : index
    %5 = vector.load %arg2[%c0_3, %c0_4] : memref<16x128xf32, #tpu.memory_space<vmem>>, vector<16x128xf32>
    %cst = arith.constant dense<0.000000e+00> : vector<8x128xf32>
    %6 = tpu.matmul %0, %5, %cst {dimension_numbers = #tpu.dot_dimension_numbers<[1], [0], [0], [1], [0, 0, 1, 1], [], []>} : vector<8x16xf32>, vector<16x128xf32>, vector<8x128xf32> -> vector<8x128xf32>
    %7 = vector.broadcast %2 : vector<1x128xf32> to vector<8x128xf32>
    %8 = arith.addf %6, %7 : vector<8x128xf32>
    %cst_5 = arith.constant 0.000000e+00 : f32
    %9 = vector.broadcast %cst_5 : f32 to vector<8x128xf32>
    %10 = arith.maximumf %8, %9 : vector<8x128xf32>
    %c0_6 = arith.constant 0 : index
    %c0_7 = arith.constant 0 : index
    %11 = vector.load %arg3[%c0_6, %c0_7] : memref<128x128xf32, #tpu.memory_space<vmem>>, vector<128x128xf32>
    %cst_8 = arith.constant dense<0.000000e+00> : vector<8x128xf32>
    %12 = tpu.matmul %10, %11, %cst_8 {dimension_numbers = #tpu.dot_dimension_numbers<[1], [0], [0], [1], [0, 0, 1, 1], [], []>} : vector<8x128xf32>, vector<128x128xf32>, vector<8x128xf32> -> vector<8x128xf32>
    %13 = vector.broadcast %3 : vector<1x128xf32> to vector<8x128xf32>
    %14 = arith.addf %12, %13 : vector<8x128xf32>
    %cst_9 = arith.constant 0.000000e+00 : f32
    %15 = vector.broadcast %cst_9 : f32 to vector<8x128xf32>
    %16 = arith.maximumf %14, %15 : vector<8x128xf32>
    %c0_10 = arith.constant 0 : index
    %c0_11 = arith.constant 0 : index
    %17 = vector.load %arg4[%c0_10, %c0_11] : memref<128x128xf32, #tpu.memory_space<vmem>>, vector<128x128xf32>
    %cst_12 = arith.constant dense<0.000000e+00> : vector<8x128xf32>
    %18 = tpu.matmul %16, %17, %cst_12 {dimension_numbers = #tpu.dot_dimension_numbers<[1], [0], [0], [1], [0, 0, 1, 1], [], []>} : vector<8x128xf32>, vector<128x128xf32>, vector<8x128xf32> -> vector<8x128xf32>
    %19 = vector.broadcast %4 : vector<1x128xf32> to vector<8x128xf32>
    %20 = arith.addf %18, %19 : vector<8x128xf32>
    %c0_13 = arith.constant 0 : index
    %c0_14 = arith.constant 0 : index
    %21 = vector.load %arg6[%c0_13, %c0_14] : memref<8x128xf32, #tpu.memory_space<vmem>>, vector<8x128xf32>
    tpu.vector_store %arg6[%c0_13, %c0_14], %20 {strides = array<i32>} : memref<8x128xf32, #tpu.memory_space<vmem>>, vector<8x128xf32>,
    return
  }
  func.func @transform_0(%arg0: i32) -> (i32, i32) {
    %c0_i32 = arith.constant 0 : i32
    %c0_i32_0 = arith.constant 0 : i32
    return %arg0, %c0_i32 : i32, i32
  }
  func.func @transform_1(%arg0: i32) -> (i32, i32) {
    %c0_i32 = arith.constant 0 : i32
    %c0_i32_0 = arith.constant 0 : i32
    %c0_i32_1 = arith.constant 0 : i32
    return %c0_i32, %c0_i32_0 : i32, i32
  }
  func.func @transform_2(%arg0: i32) -> (i32, i32) {
    %c0_i32 = arith.constant 0 : i32
    %c0_i32_0 = arith.constant 0 : i32
    %c0_i32_1 = arith.constant 0 : i32
    return %c0_i32, %c0_i32_0 : i32, i32
  }
  func.func @transform_3(%arg0: i32) -> (i32, i32) {
    %c0_i32 = arith.constant 0 : i32
    %c0_i32_0 = arith.constant 0 : i32
    %c0_i32_1 = arith.constant 0 : i32
    return %c0_i32, %c0_i32_0 : i32, i32
  }
  func.func @transform_4(%arg0: i32) -> (i32, i32) {
    %c0_i32 = arith.constant 0 : i32
    %c0_i32_0 = arith.constant 0 : i32
    %c0_i32_1 = arith.constant 0 : i32
    return %c0_i32, %c0_i32_0 : i32, i32
  }
  func.func @transform_5(%arg0: i32) -> (i32, i32) {
    %c0_i32 = arith.constant 0 : i32
    %c0_i32_0 = arith.constant 0 : i32
    return %arg0, %c0_i32 : i32, i32
  }
}

</mosaic_0001>

<llo_original>
// kernel: tpu_custom_call.1
$region0: #{tpu_custom_call.1}
  #allocation0 [shape = 'u32[]', space=smem, size = 0x4, offset = 0x4, fixed_abs, tag = 'smem constant byte address 0x4 - core index']
  #allocation1 [shape = 'u32[144,128]{1,0:T(1,128)}', space=vmem, size = 0x12000, scoped, tag = 'internal scratch']
  %s0 = inlined_call_operand.hbm [shape: f32[8,16], index: 0, kind: input, shape index: {}]
  %s1 = inlined_call_operand.hbm [shape: f32[16,128], index: 1, kind: input, shape index: {}]
  %s2 = inlined_call_operand.hbm [shape: f32[128,128], index: 2, kind: input, shape index: {}]
  %s3 = inlined_call_operand.hbm [shape: f32[128,128], index: 3, kind: input, shape index: {}]
  %s4 = inlined_call_operand.vmem [shape: f32[3,128], index: 4, kind: input, shape index: {}]
  %s5 = inlined_call_operand.hbm [shape: f32[8,128], index: 5, kind: output, shape index: {}]
  %s6 = sld [smem:[#allocation0]]
  $region46: #{tpu_custom_call.1} parent=0
    _
  %s8 = ssub.s32 1, %s6
  %s9 = scalar_select 0, %s8, %s6
  $region1: #{tpu_custom_call.1} parent=0
    #allocation2 [shape = 'u8[4096]{0}', space=vmem, size = 0x1000, scoped, tag = 'input window, operand 0, single buffered']
    #allocation3 [shape = 's32[1]{0}', space=sflag, size = 0x4, scoped, tag = 'scoped memory for tpu_custom_call.1']
    #allocation4 [shape = 's32[1]{0}', space=sflag, size = 0x4, scoped, tag = 'scoped memory for tpu_custom_call.1']
    #allocation5 [shape = 'u8[8192]{0}', space=vmem, size = 0x2000, scoped, tag = 'input window, operand 1, single buffered']
    #allocation6 [shape = 's32[1]{0}', space=sflag, size = 0x4, scoped, tag = 'scoped memory for tpu_custom_call.1']
    #allocation7 [shape = 'u8[65536]{0}', space=vmem, size = 0x10000, scoped, tag = 'input window, operand 2, single buffered']
    #allocation8 [shape = 'u8[65536]{0}', space=vmem, size = 0x10000, scoped, tag = 'input window, operand 3, single buffered']
    #allocation9 [shape = 's32[1]{0}', space=sflag, size = 0x4, scoped, tag = 'scoped memory for tpu_custom_call.1']
    #allocation10 [shape = 'u8[4096]{0}', space=vmem, size = 0x1000, scoped, tag = 'output window, operand 0, single buffered']
    %10 = vsyncpa [#allocation3], 0
    %11 = vsyncpa [#allocation6], 0
    %12 = vsyncpa [#allocation9], 0
    %13 = vsyncpa [#allocation4], 0
    // Predicated region
    $region2: #{tpu_custom_call.1} parent=1 // pred_check
      _
    $region3: #{tpu_custom_call.1} parent=1 // pred_check_branch
      %15 = sbr.rel (0) target = $region5
    $region4: #{tpu_custom_call.1} parent=1 // pred_region
      %s17 = ssub.s32 128, 128
      %18 = vsyncadd [#allocation3], %s17
      %s20 = sshll.u32 [#allocation2], 4
      %s21 = int_to_ptr.vmem [resolvable:$true] %s20
      %23 = dma.hbm_to_vmem [thread:$0]  %s0, 128, %s21, [#allocation3]
    $region5: #{tpu_custom_call.1} parent=1 // pred_fallthru
      _
    // Predicated region
    $region6: #{tpu_custom_call.1} parent=1 // pred_check
      _
    $region7: #{tpu_custom_call.1} parent=1 // pred_check_branch
      %25 = sbr.rel (0) target = $region9
    $region8: #{tpu_custom_call.1} parent=1 // pred_region
      %s27 = ssub.s32 256, 256
      %28 = vsyncadd [#allocation6], %s27
      %s29 = sshll.u32 [#allocation5], 4
      %s30 = int_to_ptr.vmem [resolvable:$true] %s29
      %35 = dma.hbm_to_vmem [thread:$0]  %s1, 256, %s30, [#allocation6], 128, 128, 8
    $region9: #{tpu_custom_call.1} parent=1 // pred_fallthru
      _
    // Predicated region
    $region10: #{tpu_custom_call.1} parent=1 // pred_check
      _
    $region11: #{tpu_custom_call.1} parent=1 // pred_check_branch
      %37 = sbr.rel (0) target = $region13
    $region12: #{tpu_custom_call.1} parent=1 // pred_region
      %s39 = ssub.s32 2048, 2048
      %40 = vsyncadd [#allocation6], %s39
      %s41 = sshll.u32 [#allocation7], 4
      %s42 = int_to_ptr.vmem [resolvable:$true] %s41
      %47 = dma.hbm_to_vmem [thread:$0]  %s2, 2048, %s42, [#allocation6], 128, 128, 8
    $region13: #{tpu_custom_call.1} parent=1 // pred_fallthru
      _
    // Predicated region
    $region14: #{tpu_custom_call.1} parent=1 // pred_check
      _
    $region15: #{tpu_custom_call.1} parent=1 // pred_check_branch
      %49 = sbr.rel (0) target = $region17
    $region16: #{tpu_custom_call.1} parent=1 // pred_region
      %s51 = ssub.s32 2048, 2048
      %52 = vsyncadd [#allocation9], %s51
      %s53 = sshll.u32 [#allocation8], 4
      %s54 = int_to_ptr.vmem [resolvable:$true] %s53
      %59 = dma.hbm_to_vmem [thread:$0]  %s3, 2048, %s54, [#allocation9], 128, 128, 8
    $region17: #{tpu_custom_call.1} parent=1 // pred_fallthru
      _
    // Predicated region
    $region18: #{tpu_custom_call.1} parent=1 // pred_check
      _
    $region19: #{tpu_custom_call.1} parent=1 // pred_check_branch
      %61 = sbr.rel (0) target = $region21
    $region20: #{tpu_custom_call.1} parent=1 // pred_region
      _
    $region21: #{tpu_custom_call.1} parent=1 // pred_fallthru
      _
    // Predicated region
    $region22: #{tpu_custom_call.1} parent=1 // pred_check
      _
    $region23: #{tpu_custom_call.1} parent=1 // pred_check_branch
      %63 = sbr.rel (0) target = $region25
    $region24: #{tpu_custom_call.1} parent=1 // pred_region
      %64 = dma.done [#allocation3], 128
    $region25: #{tpu_custom_call.1} parent=1 // pred_fallthru
      _
    // Predicated region
    $region26: #{tpu_custom_call.1} parent=1 // pred_check
      _
    $region27: #{tpu_custom_call.1} parent=1 // pred_check_branch
      %66 = sbr.rel (0) target = $region29
    $region28: #{tpu_custom_call.1} parent=1 // pred_region
      %67 = dma.done [#allocation6], 256
    $region29: #{tpu_custom_call.1} parent=1 // pred_fallthru
      _
    // Predicated region
    $region30: #{tpu_custom_call.1} parent=1 // pred_check
      _
    $region31: #{tpu_custom_call.1} parent=1 // pred_check_branch
      %69 = sbr.rel (0) target = $region33
    $region32: #{tpu_custom_call.1} parent=1 // pred_region
      %70 = dma.done [#allocation6], 2048
    $region33: #{tpu_custom_call.1} parent=1 // pred_fallthru
      _
    // Predicated region
    $region34: #{tpu_custom_call.1} parent=1 // pred_check
      _
    $region35: #{tpu_custom_call.1} parent=1 // pred_check_branch
      %72 = sbr.rel (0) target = $region37
    $region36: #{tpu_custom_call.1} parent=1 // pred_region
      %73 = dma.done [#allocation9], 2048
    $region37: #{tpu_custom_call.1} parent=1 // pred_fallthru
      _
    %v74 = vld [vmem:[#allocation2] sm:$0xff]
    %v75 = vld [vmem:[%s4] sm:$0x7]
    %v76 = vld [vmem:[#allocation5] sm:$0xff]
    %v77 = vld [vmem:[#allocation5 + $0x8] sm:$0xff]
    %v78 = vlaneseq
    %v79 = vshrl.u32 %v78, 7
    %v80 = vsub.s32 0, %v79
    %v81 = vrot.slane %v75, %v80
    %vm82 = vcmask 130048
    %v84 = vsel %vm82, %v74, 0
    %86 = vmatprep.subr.mxu0 0.0
    %87 = vmatpush1.msra.mxu0 %v76
    %88 = vmatprep.subr.mxu0 0.0
    %89 = vmatpush1.msra.mxu0 %v77
    %90 = vmatprep.subr.mxu0 0.0
    %91 = vmatpush1.msra.mxu0 0.0
    %92 = vmatprep.subr.mxu0 0.0
    %93 = vmatpush1.msra.mxu0 0.0
    %94 = vmatprep.subr.mxu0 0.0
    %95 = vmatpush1.msra.mxu0 0.0
    %96 = vmatprep.subr.mxu0 0.0
    %97 = vmatpush1.msra.mxu0 0.0
    %98 = vmatprep.subr.mxu0 0.0
    %99 = vmatpush1.msra.mxu0 0.0
    %100 = vmatprep.subr.mxu0 0.0
    %101 = vmatpush1.msra.mxu0 0.0
    %102 = vmatprep.subr.mxu0 0.0
    %103 = vmatpush1.msra.mxu0 0.0
    %104 = vmatprep.subr.mxu0 0.0
    %105 = vmatpush1.msra.mxu0 0.0
    %106 = vmatprep.subr.mxu0 0.0
    %107 = vmatpush1.msra.mxu0 0.0
    %108 = vmatprep.subr.mxu0 0.0
    %109 = vmatpush1.msra.mxu0 0.0
    %110 = vmatprep.subr.mxu0 0.0
    %111 = vmatpush1.msra.mxu0 0.0
    %112 = vmatprep.subr.mxu0 0.0
    %113 = vmatpush1.msra.mxu0 0.0
    %114 = vmatprep.subr.mxu0 0.0
    %115 = vmatpush1.msra.mxu0 0.0
    %116 = vmatprep.subr.mxu0 0.0
    %117 = vmatpush1.msra.mxu0 0.0
    %118 = vmatprep.subr.mxu0 0.0
    %119 = vmatpush1.msra.mxu0 0.0
    %120 = vmatprep.subr.mxu0 0.0
    %121 = vmatpush1.msra.mxu0 0.0
    %122 = vmatprep.subr.mxu0 0.0
    %123 = vmatpush1.msra.mxu0 0.0
    %124 = vmatprep.subr.mxu0 0.0
    %125 = vmatpush1.msra.mxu0 0.0
    %126 = vmatprep.subr.mxu0 0.0
    %127 = vmatpush1.msra.mxu0 0.0
    %128 = vmatprep.subr.mxu0 0.0
    %129 = vmatpush1.msra.mxu0 0.0
    %130 = vmatprep.subr.mxu0 0.0
    %131 = vmatpush1.msra.mxu0 0.0
    %132 = vmatprep.subr.mxu0 0.0
    %133 = vmatpush1.msra.mxu0 0.0
    %134 = vmatprep.subr.mxu0 0.0
    %135 = vmatpush1.msra.mxu0 0.0
    %136 = vmatprep.subr.mxu0 0.0
    %137 = vmatpush1.msra.mxu0 0.0
    %138 = vmatprep.subr.mxu0 0.0
    %139 = vmatpush1.msra.mxu0 0.0
    %140 = vmatprep.subr.mxu0 0.0
    %141 = vmatpush1.msra.mxu0 0.0
    %142 = vmatprep.subr.mxu0 0.0
    %143 = vmatpush1.msra.mxu0 0.0
    %144 = vmatprep.subr.mxu0 0.0
    %145 = vmatpush1.msra.mxu0 0.0
    %146 = vmatprep.subr.mxu0 0.0
    %147 = vmatpush1.msra.mxu0 0.0
    %148 = vmatprep.subr.mxu0 0.0
    %149 = vmatpush1.msra.mxu0 0.0
    %150 = vmatprep.mubr.f32.mxu0 0.0
    %151 = vmatmul.mubr.f32.gmra.mrb[0].mxu0 %v84
    %v152 = vpop.f32.mrb[0].mxu0
    %v153 = vadd.f32 %v81, %v152
    %v154 = vpop.f32.mrb[0].mxu0
    %155 = vdwg.mxu0
    %v156 = vmax.f32 %v153, 0.0
    %v157 = vld [vmem:[#allocation7] sm:$0xff]
    %v158 = vld [vmem:[#allocation7 + $0x8] sm:$0xff]
    %v159 = vld [vmem:[#allocation7 + $0x10] sm:$0xff]
    %v160 = vld [vmem:[#allocation7 + $0x18] sm:$0xff]
    %v161 = vld [vmem:[#allocation7 + $0x20] sm:$0xff]
    %v162 = vld [vmem:[#allocation7 + $0x28] sm:$0xff]
    %v163 = vld [vmem:[#allocation7 + $0x30] sm:$0xff]
    %v164 = vld [vmem:[#allocation7 + $0x38] sm:$0xff]
    %v165 = vld [vmem:[#allocation7 + $0x40] sm:$0xff]
    %v166 = vld [vmem:[#allocation7 + $0x48] sm:$0xff]
    %v167 = vld [vmem:[#allocation7 + $0x50] sm:$0xff]
    %v168 = vld [vmem:[#allocation7 + $0x58] sm:$0xff]
    %v169 = vld [vmem:[#allocation7 + $0x60] sm:$0xff]
    %v170 = vld [vmem:[#allocation7 + $0x68] sm:$0xff]
    %v171 = vld [vmem:[#allocation7 + $0x70] sm:$0xff]
    %v172 = vld [vmem:[#allocation7 + $0x78] sm:$0xff]
    %v173 = vlaneseq
    %v174 = vshrl.u32 %v173, 7
    %v175 = vsub.s32 1, %v174
    %v176 = vrot.slane %v75, %v175
    %177 = vmatprep.subr.mxu0 0.0
    %178 = vmatpush1.msra.mxu0 %v157
    %179 = vmatprep.subr.mxu0 0.0
    %180 = vmatpush1.msra.mxu0 %v158
    %181 = vmatprep.subr.mxu0 0.0
    %182 = vmatpush1.msra.mxu0 %v159
    %183 = vmatprep.subr.mxu0 0.0
    %184 = vmatpush1.msra.mxu0 %v160
    %185 = vmatprep.subr.mxu0 0.0
    %186 = vmatpush1.msra.mxu0 %v161
    %187 = vmatprep.subr.mxu0 0.0
    %188 = vmatpush1.msra.mxu0 %v162
    %189 = vmatprep.subr.mxu0 0.0
    %190 = vmatpush1.msra.mxu0 %v163
    %191 = vmatprep.subr.mxu0 0.0
    %192 = vmatpush1.msra.mxu0 %v164
    %193 = vmatprep.subr.mxu0 0.0
    %194 = vmatpush1.msra.mxu0 %v165
    %195 = vmatprep.subr.mxu0 0.0
    %196 = vmatpush1.msra.mxu0 %v166
    %197 = vmatprep.subr.mxu0 0.0
    %198 = vmatpush1.msra.mxu0 %v167
    %199 = vmatprep.subr.mxu0 0.0
    %200 = vmatpush1.msra.mxu0 %v168
    %201 = vmatprep.subr.mxu0 0.0
    %202 = vmatpush1.msra.mxu0 %v169
    %203 = vmatprep.subr.mxu0 0.0
    %204 = vmatpush1.msra.mxu0 %v170
    %205 = vmatprep.subr.mxu0 0.0
    %206 = vmatpush1.msra.mxu0 %v171
    %207 = vmatprep.subr.mxu0 0.0
    %208 = vmatpush1.msra.mxu0 %v172
    %209 = vmatprep.subr.mxu0 0.0
    %210 = vmatpush1.msra.mxu0 0.0
    %211 = vmatprep.subr.mxu0 0.0
    %212 = vmatpush1.msra.mxu0 0.0
    %213 = vmatprep.subr.mxu0 0.0
    %214 = vmatpush1.msra.mxu0 0.0
    %215 = vmatprep.subr.mxu0 0.0
    %216 = vmatpush1.msra.mxu0 0.0
    %217 = vmatprep.subr.mxu0 0.0
    %218 = vmatpush1.msra.mxu0 0.0
    %219 = vmatprep.subr.mxu0 0.0
    %220 = vmatpush1.msra.mxu0 0.0
    %221 = vmatprep.subr.mxu0 0.0
    %222 = vmatpush1.msra.mxu0 0.0
    %223 = vmatprep.subr.mxu0 0.0
    %224 = vmatpush1.msra.mxu0 0.0
    %225 = vmatprep.subr.mxu0 0.0
    %226 = vmatpush1.msra.mxu0 0.0
    %227 = vmatprep.subr.mxu0 0.0
    %228 = vmatpush1.msra.mxu0 0.0
    %229 = vmatprep.subr.mxu0 0.0
    %230 = vmatpush1.msra.mxu0 0.0
    %231 = vmatprep.subr.mxu0 0.0
    %232 = vmatpush1.msra.mxu0 0.0
    %233 = vmatprep.subr.mxu0 0.0
    %234 = vmatpush1.msra.mxu0 0.0
    %235 = vmatprep.subr.mxu0 0.0
    %236 = vmatpush1.msra.mxu0 0.0
    %237 = vmatprep.subr.mxu0 0.0
    %238 = vmatpush1.msra.mxu0 0.0
    %239 = vmatprep.subr.mxu0 0.0
    %240 = vmatpush1.msra.mxu0 0.0
    %241 = vmatprep.mubr.f32.mxu0 0.0
    %242 = vmatmul.mubr.f32.gmra.mrb[0].mxu0 %v156
    %v243 = vpop.f32.mrb[0].mxu0
    %v244 = vadd.f32 %v176, %v243
    %v245 = vpop.f32.mrb[0].mxu0
    %246 = vdwg.mxu0
    %v247 = vmax.f32 %v244, 0.0
    %v248 = vld [vmem:[#allocation8] sm:$0xff]
    %v249 = vld [vmem:[#allocation8 + $0x8] sm:$0xff]
    %v250 = vld [vmem:[#allocation8 + $0x10] sm:$0xff]
    %v251 = vld [vmem:[#allocation8 + $0x18] sm:$0xff]
    %v252 = vld [vmem:[#allocation8 + $0x20] sm:$0xff]
    %v253 = vld [vmem:[#allocation8 + $0x28] sm:$0xff]
    %v254 = vld [vmem:[#allocation8 + $0x30] sm:$0xff]
    %v255 = vld [vmem:[#allocation8 + $0x38] sm:$0xff]
    %v256 = vld [vmem:[#allocation8 + $0x40] sm:$0xff]
    %v257 = vld [vmem:[#allocation8 + $0x48] sm:$0xff]
    %v258 = vld [vmem:[#allocation8 + $0x50] sm:$0xff]
    %v259 = vld [vmem:[#allocation8 + $0x58] sm:$0xff]
    %v260 = vld [vmem:[#allocation8 + $0x60] sm:$0xff]
    %v261 = vld [vmem:[#allocation8 + $0x68] sm:$0xff]
    %v262 = vld [vmem:[#allocation8 + $0x70] sm:$0xff]
    %v263 = vld [vmem:[#allocation8 + $0x78] sm:$0xff]
    %v264 = vlaneseq
    %v265 = vshrl.u32 %v264, 7
    %v266 = vsub.s32 2, %v265
    %v267 = vrot.slane %v75, %v266
    %268 = vmatprep.subr.mxu0 0.0
    %269 = vmatpush1.msra.mxu0 %v248
    %270 = vmatprep.subr.mxu0 0.0
    %271 = vmatpush1.msra.mxu0 %v249
    %272 = vmatprep.subr.mxu0 0.0
    %273 = vmatpush1.msra.mxu0 %v250
    %274 = vmatprep.subr.mxu0 0.0
    %275 = vmatpush1.msra.mxu0 %v251
    %276 = vmatprep.subr.mxu0 0.0
    %277 = vmatpush1.msra.mxu0 %v252
    %278 = vmatprep.subr.mxu0 0.0
    %279 = vmatpush1.msra.mxu0 %v253
    %280 = vmatprep.subr.mxu0 0.0
    %281 = vmatpush1.msra.mxu0 %v254
    %282 = vmatprep.subr.mxu0 0.0
    %283 = vmatpush1.msra.mxu0 %v255
    %284 = vmatprep.subr.mxu0 0.0
    %285 = vmatpush1.msra.mxu0 %v256
    %286 = vmatprep.subr.mxu0 0.0
    %287 = vmatpush1.msra.mxu0 %v257
    %288 = vmatprep.subr.mxu0 0.0
    %289 = vmatpush1.msra.mxu0 %v258
    %290 = vmatprep.subr.mxu0 0.0
    %291 = vmatpush1.msra.mxu0 %v259
    %292 = vmatprep.subr.mxu0 0.0
    %293 = vmatpush1.msra.mxu0 %v260
    %294 = vmatprep.subr.mxu0 0.0
    %295 = vmatpush1.msra.mxu0 %v261
    %296 = vmatprep.subr.mxu0 0.0
    %297 = vmatpush1.msra.mxu0 %v262
    %298 = vmatprep.subr.mxu0 0.0
    %299 = vmatpush1.msra.mxu0 %v263
    %300 = vmatprep.subr.mxu0 0.0
    %301 = vmatpush1.msra.mxu0 0.0
    %302 = vmatprep.subr.mxu0 0.0
    %303 = vmatpush1.msra.mxu0 0.0
    %304 = vmatprep.subr.mxu0 0.0
    %305 = vmatpush1.msra.mxu0 0.0
    %306 = vmatprep.subr.mxu0 0.0
    %307 = vmatpush1.msra.mxu0 0.0
    %308 = vmatprep.subr.mxu0 0.0
    %309 = vmatpush1.msra.mxu0 0.0
    %310 = vmatprep.subr.mxu0 0.0
    %311 = vmatpush1.msra.mxu0 0.0
    %312 = vmatprep.subr.mxu0 0.0
    %313 = vmatpush1.msra.mxu0 0.0
    %314 = vmatprep.subr.mxu0 0.0
    %315 = vmatpush1.msra.mxu0 0.0
    %316 = vmatprep.subr.mxu0 0.0
    %317 = vmatpush1.msra.mxu0 0.0
    %318 = vmatprep.subr.mxu0 0.0
    %319 = vmatpush1.msra.mxu0 0.0
    %320 = vmatprep.subr.mxu0 0.0
    %321 = vmatpush1.msra.mxu0 0.0
    %322 = vmatprep.subr.mxu0 0.0
    %323 = vmatpush1.msra.mxu0 0.0
    %324 = vmatprep.subr.mxu0 0.0
    %325 = vmatpush1.msra.mxu0 0.0
    %326 = vmatprep.subr.mxu0 0.0
    %327 = vmatpush1.msra.mxu0 0.0
    %328 = vmatprep.subr.mxu0 0.0
    %329 = vmatpush1.msra.mxu0 0.0
    %330 = vmatprep.subr.mxu0 0.0
    %331 = vmatpush1.msra.mxu0 0.0
    %332 = vmatprep.mubr.f32.mxu0 0.0
    %333 = vmatmul.mubr.f32.gmra.mrb[0].mxu0 %v247
    %v334 = vpop.f32.mrb[0].mxu0
    %v335 = vadd.f32 %v267, %v334
    %v336 = vpop.f32.mrb[0].mxu0
    %337 = vdwg.mxu0
    %338 = vst [vmem:[#allocation10] sm:$0xff] %v335
    // Predicated region
    $region38: #{tpu_custom_call.1} parent=1 // pred_check
      _
    $region39: #{tpu_custom_call.1} parent=1 // pred_check_branch
      %340 = sbr.rel (0) target = $region41
    $region40: #{tpu_custom_call.1} parent=1 // pred_region
      %s342 = ssub.s32 128, 128
      %343 = vsyncadd [#allocation4], %s342
      %s345 = sshll.u32 [#allocation10], 4
      %s346 = int_to_ptr.vmem [resolvable:$true] %s345
      %348 = dma.vmem_to_hbm [thread:$0]  %s346, 128, %s5, [#allocation4]
    $region41: #{tpu_custom_call.1} parent=1 // pred_fallthru
      _
    // Predicated region
    $region42: #{tpu_custom_call.1} parent=1 // pred_check
      _
    $region43: #{tpu_custom_call.1} parent=1 // pred_check_branch
      %350 = sbr.rel (0) target = $region45
    $region44: #{tpu_custom_call.1} parent=1 // pred_region
      %351 = dma.done [#allocation4], 128
    $region45: #{tpu_custom_call.1} parent=1 // pred_fallthru
      _
    %352 = vsyncpa [#allocation3], 1
    %353 = vsyncpa [#allocation6], 1
    %354 = vsyncpa [#allocation9], 1
    %355 = vsyncpa [#allocation4], 1

</llo_original>
